<compile_context>
chip_gen: v7x
topology: tpu7x:2x2x1
jax: 0.10.0
libtpu: 0.0.40
codegen_flags: <defaults>
</compile_context>

<pallas_src>
import functools

import jax
import jax.numpy as jnp
from jax.experimental import pallas as pl
from jax.experimental.pallas import tpu as pltpu


# ----------------------------------------------------------------------------
# Tile-size selection helpers
# ----------------------------------------------------------------------------

def _round_up(x, m):
    return ((x + m - 1) // m) * m


def _vmem_capacity_bytes():
    """Physical VMEM capacity; conservative 64 MiB fallback (v7x-sized)."""
    try:
        info = pltpu.get_tpu_info()
        for attr in ("vmem_capacity_bytes", "vmem_size_bytes", "vmem_bytes"):
            v = getattr(info, attr, None)
            if v:
                return int(v)
    except Exception:
        pass
    return 64 * 1024 * 1024


def _tile_caps():
    """(cap_m, cap_n, cap_k, vmem_limit_bytes) tuned per VMEM generation."""
    cap_bytes = _vmem_capacity_bytes()
    vmem_limit = int(cap_bytes * 3 // 4)          # 96 MiB on v5e/v6e, 48 MiB on v7x
    if cap_bytes >= 96 * 1024 * 1024:             # v5e / v6e: 128 MiB physical VMEM
        cap_m, cap_n, cap_k = 512, 1024, 2048
    else:                                         # v7x (64 MiB) or unknown
        cap_m, cap_n, cap_k = 512, 512, 1024
    return cap_m, cap_n, cap_k, vmem_limit


def _largest_divisor(total, align, cap):
    """Largest d <= cap with d % align == 0 and total % d == 0."""
    best = align
    d = align
    limit = min(cap, total)
    while d <= limit:
        if total % d == 0:
            best = d
        d += align
    return best


def _nk_tiling(dim, cap):
    """Returns (dim_pad, tile) for a lane (last-dim-of-a-block) dimension."""
    if dim <= cap:
        return dim, dim                       # full-extent block: no padding at all
    dim_pad = _round_up(dim, 128)             # tiled blocks must be 128-aligned
    return dim_pad, _largest_divisor(dim_pad, 128, cap)


def _m_tiling(M, cap_m):
    """Returns (tm, M_pad) for the row dimension."""
    if M <= cap_m:
        return M, M                           # full-extent block: no pad / slice
    M8 = _round_up(M, 8)
    tm = _largest_divisor(M8, 8, cap_m)
    if tm >= max(64, cap_m // 4):
        return tm, M8                         # <=7 padded rows, no extra tiling pad
    return cap_m, _round_up(M, cap_m)         # fallback: pad up to a cap_m multiple


# ----------------------------------------------------------------------------
# Kernels
# ----------------------------------------------------------------------------

def _linear_relu_kernel_direct(x_ref, w_ref, b_ref, o_ref):
    """f32 output: accumulate directly into the VMEM-resident output block."""
    k = pl.program_id(2)

    @pl.when(k == 0)
    def _init():
        # Fold bias into the accumulator init: removes the epilogue add.
        o_ref[...] = jnp.broadcast_to(b_ref[...].astype(jnp.float32), o_ref.shape)

    x = x_ref[...]
    w = w_ref[...]
    if x.dtype != w.dtype:                      # bf16 compute path: cast x tile
        x = x.astype(w.dtype)
    o_ref[...] += jnp.dot(x, w, preferred_element_type=jnp.float32)

    @pl.when(k == pl.num_programs(2) - 1)
    def _finalize():
        # ReLU in f32; dropout = identity (eval mode).
        o_ref[...] = jnp.maximum(o_ref[...], 0.0)


def _linear_relu_kernel_scratch(x_ref, w_ref, b_ref, o_ref, acc_ref):
    """Narrow output dtypes: accumulate in an f32 scratch, cast at the end."""
    k = pl.program_id(2)

    @pl.when(k == 0)
    def _init():
        acc_ref[...] = jnp.broadcast_to(b_ref[...].astype(jnp.float32),
                                        acc_ref.shape)

    x = x_ref[...]
    w = w_ref[...]
    if x.dtype != w.dtype:
        x = x.astype(w.dtype)
    acc_ref[...] += jnp.dot(x, w, preferred_element_type=jnp.float32)

    @pl.when(k == pl.num_programs(2) - 1)
    def _finalize():
        o_ref[...] = jnp.maximum(acc_ref[...], 0.0).astype(o_ref.dtype)


# ----------------------------------------------------------------------------
# Forward wrapper
# ----------------------------------------------------------------------------

@functools.partial(jax.jit,
                   static_argnames=("n_out", "tn", "tk", "cap_m", "vmem_limit"))
def _linear_forward(x, w_t, b2d, *, n_out, tn, tk, cap_m, vmem_limit):
    """x: (M, K); w_t: (K_pad, N_pad) pre-transposed/padded; b2d: (1, N_pad)."""
    M, K = x.shape
    K_pad, N_pad = w_t.shape

    tm, M_pad = _m_tiling(M, cap_m)
    if M_pad != M or K_pad != K:
        x = jnp.pad(x, ((0, M_pad - M), (0, K_pad - K)))

    grid = (M_pad // tm, N_pad // tn, K_pad // tk)

    out_dtype = x.dtype
    direct = out_dtype == jnp.float32
    kernel = _linear_relu_kernel_direct if direct else _linear_relu_kernel_scratch
    scratch = [] if direct else [pltpu.VMEM((tm, tn), jnp.float32)]

    out = pl.pallas_call(
        kernel,
        out_shape=jax.ShapeDtypeStruct((M_pad, N_pad), out_dtype),
        grid_spec=pltpu.PrefetchScalarGridSpec(
            num_scalar_prefetch=0,
            grid=grid,
            in_specs=[
                pl.BlockSpec((tm, tk), lambda i, j, k: (i, k)),   # x tile
                pl.BlockSpec((tk, tn), lambda i, j, k: (k, j)),   # weight tile
                pl.BlockSpec((1, tn), lambda i, j, k: (0, j)),    # bias tile
            ],
            out_specs=pl.BlockSpec((tm, tn), lambda i, j, k: (i, j)),
            scratch_shapes=scratch,
        ),
        compiler_params=pltpu.CompilerParams(
            dimension_semantics=("parallel", "parallel", "arbitrary"),
            vmem_limit_bytes=vmem_limit,
        ),
    )(x, w_t, b2d)

    if M_pad != M or N_pad != n_out:
        out = out[:M, :n_out]
    return out


def make_linear(weight, bias, *, compute_dtype=None):
    """One-time param prep; returns a forward closure computing
    relu(x @ W.T + b) (dropout = identity, eval mode).

    weight: (out_features, in_features)  -- torch nn.Linear layout
    bias:   (out_features,)
    compute_dtype: optional dtype for the matmul operands (e.g. jnp.bfloat16
      for ~3x MXU throughput and half the weight streaming); accumulation and
      epilogue stay in f32. Default keeps the original dtype (exact numerics).
    """
    weight = jnp.asarray(weight)
    bias = jnp.asarray(bias)
    N, K = weight.shape

    cap_m, cap_n, cap_k, vmem_limit = _tile_caps()
    N_pad, tn = _nk_tiling(N, cap_n)
    K_pad, tk = _nk_tiling(K, cap_k)

    w_dtype = compute_dtype if compute_dtype is not None else weight.dtype
    # Transpose + (zero-)pad + cast exactly once, outside the per-call path.
    w_t = jnp.zeros((K_pad, N_pad), dtype=w_dtype)
    w_t = w_t.at[:K, :N].set(weight.T.astype(w_dtype))
    b2d = jnp.zeros((1, N_pad), dtype=jnp.float32)
    b2d = b2d.at[0, :N].set(bias.astype(jnp.float32))
    w_t, b2d = jax.block_until_ready((w_t, b2d))

    def forward(x):
        return _linear_forward(x, w_t, b2d, n_out=N, tn=tn, tk=tk,
                               cap_m=cap_m, vmem_limit=vmem_limit)

    return forward


# ----------------------------------------------------------------------------
# Self-test
# ----------------------------------------------------------------------------

if __name__ == "__main__":
    # --- Test 1: small shapes consistent with the module (batch=8, 32 -> 64).
    batch, in_features, out_features = 8, 32, 64
    key = jax.random.PRNGKey(0)
    kx, kw, kb = jax.random.split(key, 3)
    bound = 1.0 / (in_features ** 0.5)
    weight = jax.random.uniform(kw, (out_features, in_features),
                                minval=-bound, maxval=bound, dtype=jnp.float32)
    bias = jax.random.uniform(kb, (out_features,),
                              minval=-bound, maxval=bound, dtype=jnp.float32)
    x = jax.random.normal(kx, (batch, in_features), dtype=jnp.float32)

    forward = make_linear(weight, bias)
    out = jax.block_until_ready(forward(x))
    ref = jnp.maximum(x @ weight.T + bias, 0.0)
    assert out.shape == (batch, out_features)
    assert jnp.allclose(out, ref, atol=1e-5, rtol=1e-5), \
        float(jnp.max(jnp.abs(out - ref)))

    # --- Test 2: exercises M tiling (+row padding), K accumulation on v7x,
    #     and the no-over-padding N path (N=384 stays 384).
    M2, K2, N2 = 1030, 1536, 384
    k2x, k2w, k2b = jax.random.split(jax.random.PRNGKey(1), 3)
    b2 = 1.0 / (K2 ** 0.5)
    w2 = jax.random.uniform(k2w, (N2, K2), minval=-b2, maxval=b2,
                            dtype=jnp.float32)
    bias2 = jax.random.uniform(k2b, (N2,), minval=-b2, maxval=b2,
                               dtype=jnp.float32)
    x2 = jax.random.normal(k2x, (M2, K2), dtype=jnp.float32)

    out2 = jax.block_until_ready(make_linear(w2, bias2)(x2))
    ref2 = jnp.maximum(
        jax.lax.dot_general(x2, w2, (((1,), (1,)), ((), ())),
                            precision=jax.lax.Precision.HIGHEST) + bias2, 0.0)
    assert out2.shape == (M2, N2)
    assert jnp.allclose(out2, ref2, atol=5e-3, rtol=5e-3), \
        float(jnp.max(jnp.abs(out2 - ref2)))

    # --- Test 3: optional bf16 compute path (f32 accumulation / output).
    out3 = jax.block_until_ready(
        make_linear(w2, bias2, compute_dtype=jnp.bfloat16)(x2))
    ref3 = jnp.maximum(
        jnp.dot(x2.astype(jnp.bfloat16), w2.T.astype(jnp.bfloat16),
                preferred_element_type=jnp.float32) + bias2, 0.0)
    assert out3.shape == (M2, N2)
    assert jnp.allclose(out3, ref3, atol=3e-2, rtol=3e-2), \
        float(jnp.max(jnp.abs(out3 - ref3)))

    print("KERNEL_OK")
</pallas_src>

<mosaic_0001>
module attributes {stable_mosaic.version = 11 : i64} {
  func.func @_linear_relu_kernel_direct(%arg0: i32, %arg1: i32, %arg2: i32, %arg3: memref<8x32xf32, #tpu.memory_space<vmem>>, %arg4: memref<32x64xf32, #tpu.memory_space<vmem>>, %arg5: memref<1x64xf32, #tpu.memory_space<vmem>>, %arg6: memref<8x64xf32, #tpu.memory_space<vmem>>) attributes {dimension_semantics = [#tpu.dimension_semantics<parallel>, #tpu.dimension_semantics<parallel>, #tpu.dimension_semantics<arbitrary>], iteration_bounds = array<i64: 1, 1, 1>, scalar_prefetch = 0 : i64, scratch_operands = 0 : i64, tpu.core_type = #tpu.core_type<tc>, window_params = [{transform_indices = @transform_0, window_bounds = array<i64: 8, 32>}, {transform_indices = @transform_1, window_bounds = array<i64: 32, 64>}, {transform_indices = @transform_2, window_bounds = array<i64: 1, 64>}, {transform_indices = @transform_3, window_bounds = array<i64: 8, 64>}]} {
    %c0_i32 = arith.constant 0 : i32
    %0 = arith.cmpi eq, %arg2, %c0_i32 : i32
    %1 = arith.extui %0 : i1 to i32
    %c0_i32_0 = arith.constant 0 : i32
    %2 = arith.cmpi ne, %1, %c0_i32_0 : i32
    scf.if %2 {
      %c0_10 = arith.constant 0 : index
      %c0_11 = arith.constant 0 : index
      %12 = vector.load %arg5[%c0_10, %c0_11] : memref<1x64xf32, #tpu.memory_space<vmem>>, vector<1x64xf32>
      %13 = vector.shape_cast %12 : vector<1x64xf32> to vector<1x64xf32>
      %14 = vector.broadcast %13 : vector<1x64xf32> to vector<8x64xf32>
      %c0_12 = arith.constant 0 : index
      %c0_13 = arith.constant 0 : index
      %15 = vector.load %arg6[%c0_12, %c0_13] : memref<8x64xf32, #tpu.memory_space<vmem>>, vector<8x64xf32>
      tpu.vector_store %arg6[%c0_12, %c0_13], %14 {strides = array<i32>} : memref<8x64xf32, #tpu.memory_space<vmem>>, vector<8x64xf32>,
    } else {
    }
    %c0 = arith.constant 0 : index
    %c0_1 = arith.constant 0 : index
    %3 = vector.load %arg3[%c0, %c0_1] : memref<8x32xf32, #tpu.memory_space<vmem>>, vector<8x32xf32>
    %c0_2 = arith.constant 0 : index
    %c0_3 = arith.constant 0 : index
    %4 = vector.load %arg4[%c0_2, %c0_3] : memref<32x64xf32, #tpu.memory_space<vmem>>, vector<32x64xf32>
    %c0_4 = arith.constant 0 : index
    %c0_5 = arith.constant 0 : index
    %5 = vector.load %arg6[%c0_4, %c0_5] : memref<8x64xf32, #tpu.memory_space<vmem>>, vector<8x64xf32>
    %cst = arith.constant dense<0.000000e+00> : vector<8x64xf32>
    %6 = tpu.matmul %3, %4, %cst {dimension_numbers = #tpu.dot_dimension_numbers<[1], [0], [0], [1], [0, 0, 1, 1], [], []>} : vector<8x32xf32>, vector<32x64xf32>, vector<8x64xf32> -> vector<8x64xf32>
    %7 = arith.addf %5, %6 : vector<8x64xf32>
    %c0_6 = arith.constant 0 : index
    %c0_7 = arith.constant 0 : index
    %8 = vector.load %arg6[%c0_6, %c0_7] : memref<8x64xf32, #tpu.memory_space<vmem>>, vector<8x64xf32>
    tpu.vector_store %arg6[%c0_6, %c0_7], %7 {strides = array<i32>} : memref<8x64xf32, #tpu.memory_space<vmem>>, vector<8x64xf32>,
    %c0_i32_8 = arith.constant 0 : i32
    %9 = arith.cmpi eq, %arg2, %c0_i32_8 : i32
    %10 = arith.extui %9 : i1 to i32
    %c0_i32_9 = arith.constant 0 : i32
    %11 = arith.cmpi ne, %10, %c0_i32_9 : i32
    scf.if %11 {
      %c0_10 = arith.constant 0 : index
      %c0_11 = arith.constant 0 : index
      %12 = vector.load %arg6[%c0_10, %c0_11] : memref<8x64xf32, #tpu.memory_space<vmem>>, vector<8x64xf32>
      %cst_12 = arith.constant 0.000000e+00 : f32
      %13 = vector.broadcast %cst_12 : f32 to vector<8x64xf32>
      %14 = arith.maximumf %12, %13 : vector<8x64xf32>
      %c0_13 = arith.constant 0 : index
      %c0_14 = arith.constant 0 : index
      %15 = vector.load %arg6[%c0_13, %c0_14] : memref<8x64xf32, #tpu.memory_space<vmem>>, vector<8x64xf32>
      tpu.vector_store %arg6[%c0_13, %c0_14], %14 {strides = array<i32>} : memref<8x64xf32, #tpu.memory_space<vmem>>, vector<8x64xf32>,
    } else {
    }
    return
  }
  func.func @transform_0(%arg0: i32, %arg1: i32, %arg2: i32) -> (i32, i32) {
    %c0_i32 = arith.constant 0 : i32
    return %arg0, %arg2 : i32, i32
  }
  func.func @transform_1(%arg0: i32, %arg1: i32, %arg2: i32) -> (i32, i32) {
    %c0_i32 = arith.constant 0 : i32
    return %arg2, %arg1 : i32, i32
  }
  func.func @transform_2(%arg0: i32, %arg1: i32, %arg2: i32) -> (i32, i32) {
    %c0_i32 = arith.constant 0 : i32
    %c0_i32_0 = arith.constant 0 : i32
    return %c0_i32, %arg1 : i32, i32
  }
  func.func @transform_3(%arg0: i32, %arg1: i32, %arg2: i32) -> (i32, i32) {
    %c0_i32 = arith.constant 0 : i32
    return %arg0, %arg1 : i32, i32
  }
}

</mosaic_0001>

<llo_original>
// kernel: _linear_forward.1
$region0: #{_linear_forward.1}
  #allocation0 [shape = 'u32[]', space=smem, size = 0x4, offset = 0x4, fixed_abs, tag = 'smem constant byte address 0x4 - core index']
  #allocation1 [shape = 'u32[144,128]{1,0:T(1,128)}', space=vmem, size = 0x12000, scoped, tag = 'internal scratch']
  %s0 = inlined_call_operand.hbm [shape: f32[8,32], index: 0, kind: input, shape index: {}]
  %s1 = inlined_call_operand.hbm [shape: f32[32,64], index: 1, kind: input, shape index: {}]
  %s2 = inlined_call_operand.vmem [shape: f32[1,64], index: 2, kind: input, shape index: {}]
  %s3 = inlined_call_operand.hbm [shape: f32[8,64], index: 3, kind: output, shape index: {}]
  %s4 = sld [smem:[#allocation0]]
  $region38: #{_linear_forward.1} parent=0
    _
  %s6 = ssub.s32 1, %s4
  %s7 = scalar_select 0, %s6, %s4
  $region1: #{_linear_forward.1} parent=0
    #allocation2 [shape = 'u8[4096]{0}', space=vmem, size = 0x1000, scoped, tag = 'input window, operand 0, single buffered']
    #allocation3 [shape = 's32[1]{0}', space=sflag, size = 0x4, scoped, tag = 'scoped memory for _linear_forward.1']
    #allocation4 [shape = 's32[1]{0}', space=sflag, size = 0x4, scoped, tag = 'scoped memory for _linear_forward.1']
    #allocation5 [shape = 'u8[16384]{0}', space=vmem, size = 0x4000, scoped, tag = 'input window, operand 1, single buffered']
    #allocation6 [shape = 's32[1]{0}', space=sflag, size = 0x4, scoped, tag = 'scoped memory for _linear_forward.1']
    #allocation7 [shape = 'u8[4096]{0}', space=vmem, size = 0x1000, scoped, tag = 'output window, operand 0, single buffered']
    %8 = vsyncpa [#allocation3], 0
    %9 = vsyncpa [#allocation6], 0
    %10 = vsyncpa [#allocation4], 0
    // Predicated region
    $region2: #{_linear_forward.1} parent=1 // pred_check
      _
    $region3: #{_linear_forward.1} parent=1 // pred_check_branch
      %12 = sbr.rel (0) target = $region5
    $region4: #{_linear_forward.1} parent=1 // pred_region
      %s14 = ssub.s32 128, 128
      %15 = vsyncadd [#allocation3], %s14
      %s17 = sshll.u32 [#allocation2], 4
      %s18 = int_to_ptr.vmem [resolvable:$true] %s17
      %20 = dma.hbm_to_vmem [thread:$0]  %s0, 128, %s18, [#allocation3]
    $region5: #{_linear_forward.1} parent=1 // pred_fallthru
      _
    // Predicated region
    $region6: #{_linear_forward.1} parent=1 // pred_check
      _
    $region7: #{_linear_forward.1} parent=1 // pred_check_branch
      %22 = sbr.rel (0) target = $region9
    $region8: #{_linear_forward.1} parent=1 // pred_region
      %s24 = ssub.s32 512, 512
      %25 = vsyncadd [#allocation6], %s24
      %s26 = sshll.u32 [#allocation5], 4
      %s27 = int_to_ptr.vmem [resolvable:$true] %s26
      %32 = dma.hbm_to_vmem [thread:$0]  %s1, 512, %s27, [#allocation6], 128, 128, 8
    $region9: #{_linear_forward.1} parent=1 // pred_fallthru
      _
    // Predicated region
    $region10: #{_linear_forward.1} parent=1 // pred_check
      _
    $region11: #{_linear_forward.1} parent=1 // pred_check_branch
      %34 = sbr.rel (0) target = $region13
    $region12: #{_linear_forward.1} parent=1 // pred_region
      _
    $region13: #{_linear_forward.1} parent=1 // pred_fallthru
      _
    // Predicated region
    $region14: #{_linear_forward.1} parent=1 // pred_check
      _
    $region15: #{_linear_forward.1} parent=1 // pred_check_branch
      %36 = sbr.rel (0) target = $region17
    $region16: #{_linear_forward.1} parent=1 // pred_region
      %37 = dma.done [#allocation3], 128
    $region17: #{_linear_forward.1} parent=1 // pred_fallthru
      _
    // Predicated region
    $region18: #{_linear_forward.1} parent=1 // pred_check
      _
    $region19: #{_linear_forward.1} parent=1 // pred_check_branch
      %39 = sbr.rel (0) target = $region21
    $region20: #{_linear_forward.1} parent=1 // pred_region
      %40 = dma.done [#allocation6], 512
    $region21: #{_linear_forward.1} parent=1 // pred_fallthru
      _
    %p41 = scmp.eq.s32.totalorder 0, 0
    // Predicated region
    $region22: #{_linear_forward.1} parent=1 // pred_check
      %p42 = pneg %p41
    $region23: #{_linear_forward.1} parent=1 // pred_check_branch
      %44 = sbr.rel (%p42) target = $region25
    $region24: #{_linear_forward.1} parent=1 // pred_region
      %v45 = vld [vmem:[%s2] sm:$0x1]
      %v47 = vlaneseq
      %v48 = vshrl.u32 %v47, 7
      %v49 = vsub.s32 0, %v48
      %v50 = vrot.slane %v45, %v49
      %vm52 = vcmask 523264
      %53 = vst.msk [vmem:[#allocation7] sm:$0xff] %vm52, %v50
    $region25: #{_linear_forward.1} parent=1 // pred_fallthru
      _
    %v54 = vld [vmem:[#allocation2] sm:$0xff]
    %v55 = vld [vmem:[#allocation5] sm:$0xff]
    %v56 = vld [vmem:[#allocation5 + $0x8] sm:$0xff]
    %v57 = vld [vmem:[#allocation5 + $0x10] sm:$0xff]
    %v58 = vld [vmem:[#allocation5 + $0x18] sm:$0xff]
    %v59 = vld [vmem:[#allocation7] sm:$0xff]
    %vm60 = vcmask 261120
    %v62 = vsel %vm60, %v54, 0
    %64 = vmatprep.subr.mxu0 0.0
    %65 = vmatpush1.msra.mxu0 %v55
    %66 = vmatprep.subr.mxu0 0.0
    %67 = vmatpush1.msra.mxu0 %v56
    %68 = vmatprep.subr.mxu0 0.0
    %69 = vmatpush1.msra.mxu0 %v57
    %70 = vmatprep.subr.mxu0 0.0
    %71 = vmatpush1.msra.mxu0 %v58
    %72 = vmatprep.subr.mxu0 0.0
    %73 = vmatpush1.msra.mxu0 0.0
    %74 = vmatprep.subr.mxu0 0.0
    %75 = vmatpush1.msra.mxu0 0.0
    %76 = vmatprep.subr.mxu0 0.0
    %77 = vmatpush1.msra.mxu0 0.0
    %78 = vmatprep.subr.mxu0 0.0
    %79 = vmatpush1.msra.mxu0 0.0
    %80 = vmatprep.subr.mxu0 0.0
    %81 = vmatpush1.msra.mxu0 0.0
    %82 = vmatprep.subr.mxu0 0.0
    %83 = vmatpush1.msra.mxu0 0.0
    %84 = vmatprep.subr.mxu0 0.0
    %85 = vmatpush1.msra.mxu0 0.0
    %86 = vmatprep.subr.mxu0 0.0
    %87 = vmatpush1.msra.mxu0 0.0
    %88 = vmatprep.subr.mxu0 0.0
    %89 = vmatpush1.msra.mxu0 0.0
    %90 = vmatprep.subr.mxu0 0.0
    %91 = vmatpush1.msra.mxu0 0.0
    %92 = vmatprep.subr.mxu0 0.0
    %93 = vmatpush1.msra.mxu0 0.0
    %94 = vmatprep.subr.mxu0 0.0
    %95 = vmatpush1.msra.mxu0 0.0
    %96 = vmatprep.subr.mxu0 0.0
    %97 = vmatpush1.msra.mxu0 0.0
    %98 = vmatprep.subr.mxu0 0.0
    %99 = vmatpush1.msra.mxu0 0.0
    %100 = vmatprep.subr.mxu0 0.0
    %101 = vmatpush1.msra.mxu0 0.0
    %102 = vmatprep.subr.mxu0 0.0
    %103 = vmatpush1.msra.mxu0 0.0
    %104 = vmatprep.subr.mxu0 0.0
    %105 = vmatpush1.msra.mxu0 0.0
    %106 = vmatprep.subr.mxu0 0.0
    %107 = vmatpush1.msra.mxu0 0.0
    %108 = vmatprep.subr.mxu0 0.0
    %109 = vmatpush1.msra.mxu0 0.0
    %110 = vmatprep.subr.mxu0 0.0
    %111 = vmatpush1.msra.mxu0 0.0
    %112 = vmatprep.subr.mxu0 0.0
    %113 = vmatpush1.msra.mxu0 0.0
    %114 = vmatprep.subr.mxu0 0.0
    %115 = vmatpush1.msra.mxu0 0.0
    %116 = vmatprep.subr.mxu0 0.0
    %117 = vmatpush1.msra.mxu0 0.0
    %118 = vmatprep.subr.mxu0 0.0
    %119 = vmatpush1.msra.mxu0 0.0
    %120 = vmatprep.subr.mxu0 0.0
    %121 = vmatpush1.msra.mxu0 0.0
    %122 = vmatprep.subr.mxu0 0.0
    %123 = vmatpush1.msra.mxu0 0.0
    %124 = vmatprep.subr.mxu0 0.0
    %125 = vmatpush1.msra.mxu0 0.0
    %126 = vmatprep.subr.mxu0 0.0
    %127 = vmatpush1.msra.mxu0 0.0
    %128 = vmatprep.mubr.f32.mxu0 0.0
    %129 = vmatmul.mubr.f32.gmra.mrb[0].mxu0 %v62
    %v130 = vpop.f32.mrb[0].mxu0
    %v131 = vadd.f32 0.0, %v130
    %v132 = vpop.f32.mrb[0].mxu0
    %133 = vdwg.mxu0
    %v134 = vadd.f32 %v59, %v131
    %vm135 = vcmask 523264
    %136 = vst.msk [vmem:[#allocation7] sm:$0xff] %vm135, %v134
    // Predicated region
    $region26: #{_linear_forward.1} parent=1 // pred_check
      %p137 = pneg %p41
    $region27: #{_linear_forward.1} parent=1 // pred_check_branch
      %139 = sbr.rel (%p137) target = $region29
    $region28: #{_linear_forward.1} parent=1 // pred_region
      %v140 = vld [vmem:[#allocation7] sm:$0xff]
      %v141 = vmax.f32 %v140, 0.0
      %142 = vst.msk [vmem:[#allocation7] sm:$0xff] %vm135, %v141
    $region29: #{_linear_forward.1} parent=1 // pred_fallthru
      _
    // Predicated region
    $region30: #{_linear_forward.1} parent=1 // pred_check
      _
    $region31: #{_linear_forward.1} parent=1 // pred_check_branch
      %144 = sbr.rel (0) target = $region33
    $region32: #{_linear_forward.1} parent=1 // pred_region
      %s146 = ssub.s32 128, 128
      %147 = vsyncadd [#allocation4], %s146
      %s149 = sshll.u32 [#allocation7], 4
      %s150 = int_to_ptr.vmem [resolvable:$true] %s149
      %152 = dma.vmem_to_hbm [thread:$0]  %s150, 128, %s3, [#allocation4]
    $region33: #{_linear_forward.1} parent=1 // pred_fallthru
      _
    // Predicated region
    $region34: #{_linear_forward.1} parent=1 // pred_check
      _
    $region35: #{_linear_forward.1} parent=1 // pred_check_branch
      %154 = sbr.rel (0) target = $region37
    $region36: #{_linear_forward.1} parent=1 // pred_region
      %155 = dma.done [#allocation4], 128
    $region37: #{_linear_forward.1} parent=1 // pred_fallthru
      _
    %156 = vsyncpa [#allocation3], 1
    %157 = vsyncpa [#allocation6], 1
    %158 = vsyncpa [#allocation4], 1

</llo_original>
